<compile_context>
chip_gen: v7x
topology: tpu7x:2x2x1
jax: 0.10.0
libtpu: 0.0.40
codegen_flags: <defaults>
</compile_context>

<pallas_src>
import jax
import jax.numpy as jnp
from jax.experimental import pallas as pl
from jax.experimental.pallas import tpu as pltpu


def _round_up(n, m):
    return ((n + m - 1) // m) * m


def _cdiv(a, b):
    return -(-a // b)


def _pad2(a, shape):
    return jnp.pad(a, [(0, t - s) for s, t in zip(a.shape, shape)])


def _disc_kernel(x_ref, w1_ref, b1_ref, w2_ref, b2_ref, w3_ref, b3_ref, o_ref):
    # x arrives unpadded f32; cast to bf16 in VMEM (no extra HBM pass).
    xb = x_ref[...].astype(jnp.bfloat16)

    # Layer 1: Linear (bf16 MXU operands, f32 accumulate) + bias/ReLU in f32.
    h1 = jnp.dot(xb, w1_ref[...], preferred_element_type=jnp.float32)
    h1 = jnp.maximum(h1 + b1_ref[...], 0.0)

    # Layer 2.
    h2 = jnp.dot(h1.astype(jnp.bfloat16), w2_ref[...],
                 preferred_element_type=jnp.float32)
    h2 = jnp.maximum(h2 + b2_ref[...], 0.0)

    # Layer 3: single output unit -> f32 VPU multiply + cross-lane reduce,
    # then a narrow (TM, 1) store instead of a 128-lane slab.
    logit = jnp.sum(h2 * w3_ref[...], axis=-1, keepdims=True) + b3_ref[0]
    o_ref[...] = jax.nn.sigmoid(logit)


def prepare_params(w1, b1, w2, b2, w3, b3):
    """One-time (host-side) weight prep.

    - hidden dims zero-padded to multiples of 128 (exact through Linear+ReLU)
    - layer-1/2 weights cast to bf16 for the MXU (biases stay f32)
    - layer-3 weight kept f32 as a (1, h1_p) row (used as multiply+reduce),
      layer-3 bias flattened to a (1,) f32 SMEM scalar.
    Weight layout is [in, out] (transposed vs. torch.nn.Linear.weight), so the
    kernel computes y = x @ w + b directly.
    """
    d_in, h0 = w1.shape
    h1 = w2.shape[1]
    h0_p = _round_up(h0, 128)
    h1_p = _round_up(h1, 128)

    w1p = _pad2(w1, (d_in, h0_p)).astype(jnp.bfloat16)
    b1p = _pad2(b1.reshape(1, -1), (1, h0_p)).astype(jnp.float32)
    w2p = _pad2(w2, (h0_p, h1_p)).astype(jnp.bfloat16)
    b2p = _pad2(b2.reshape(1, -1), (1, h1_p)).astype(jnp.float32)
    w3p = _pad2(w3.reshape(1, -1), (1, h1_p)).astype(jnp.float32)
    b3p = b3.reshape(-1).astype(jnp.float32)  # shape (1,) -> SMEM scalar
    return w1p, b1p, w2p, b2p, w3p, b3p


def _choose_tm(batch, tm_max=1024):
    """Adaptive batch tile: multiple of 8, capped, avoids 2x batch-pad blowup,
    and gives >=2 grid steps for large batches (v7x megacore)."""
    b8 = _round_up(batch, 8)
    if b8 <= tm_max:
        steps = 2 if b8 >= 512 else 1
    else:
        steps = max(_cdiv(b8, tm_max), 2)
    return _round_up(_cdiv(b8, steps), 8)


def discriminator_forward(x, prepared_params, *, tm=1024):
    """x: [B, input_size] float -> [B, 1] probabilities."""
    w1p, b1p, w2p, b2p, w3p, b3p = prepared_params
    B, d_in = x.shape
    assert d_in == w1p.shape[0], "input feature dim mismatch with prepared params"
    h0_p = w1p.shape[1]
    h1_p = w2p.shape[1]

    TM = _choose_tm(B, tm)
    B_p = _round_up(B, TM)
    xp = x.astype(jnp.float32)
    if B_p != B:
        # Row-only zero pad (no feature-dim pad / dtype copy in HBM).
        xp = jnp.pad(xp, ((0, B_p - B), (0, 0)))

    out = pl.pallas_call(
        _disc_kernel,
        out_shape=jax.ShapeDtypeStruct((B_p, 1), jnp.float32),
        grid=(B_p // TM,),
        in_specs=[
            # Streaming input: one batch tile per grid step; last dim equals
            # the full array dim, so it need not be a multiple of 128.
            pl.BlockSpec((TM, d_in), lambda i: (i, 0)),
            # Weights / biases: constant index_map -> DMA'd once, resident.
            pl.BlockSpec((d_in, h0_p), lambda i: (0, 0)),   # w1
            pl.BlockSpec((1, h0_p), lambda i: (0, 0)),      # b1
            pl.BlockSpec((h0_p, h1_p), lambda i: (0, 0)),   # w2
            pl.BlockSpec((1, h1_p), lambda i: (0, 0)),      # b2
            pl.BlockSpec((1, h1_p), lambda i: (0, 0)),      # w3 row
            # Final bias is a true scalar: keep it in SMEM.
            pl.BlockSpec(memory_space=pltpu.MemorySpace.SMEM),
        ],
        # Narrow writeback: (TM, 1) f32 tile, wrapper only trims batch padding.
        out_specs=pl.BlockSpec((TM, 1), lambda i: (i, 0)),
        compiler_params=pltpu.CompilerParams(
            dimension_semantics=("parallel",),
            vmem_limit_bytes=32 * 1024 * 1024,
        ),
    )(xp, w1p, b1p, w2p, b2p, w3p, b3p)

    return out[:B]


def init_params(key, input_size, hidden_sizes):
    """Deterministic init (shapes match nn.Linear layers, weights transposed)."""
    h0, h1 = hidden_sizes
    ks = jax.random.split(key, 6)

    def uniform_init(k, fan_in, shape):
        bound = 1.0 / jnp.sqrt(fan_in)
        return jax.random.uniform(k, shape, jnp.float32, -bound, bound)

    w1 = uniform_init(ks[0], input_size, (input_size, h0))
    b1 = uniform_init(ks[1], input_size, (1, h0))
    w2 = uniform_init(ks[2], h0, (h0, h1))
    b2 = uniform_init(ks[3], h0, (1, h1))
    w3 = uniform_init(ks[4], h1, (h1, 1))
    b3 = uniform_init(ks[5], h1, (1, 1))
    return w1, b1, w2, b2, w3, b3


if __name__ == "__main__":
    batch = 8
    input_size = 32
    hidden_sizes = (64, 32)

    key = jax.random.PRNGKey(0)
    kx, kp = jax.random.split(key)
    x = jax.random.normal(kx, (batch, input_size), jnp.float32)
    w1, b1, w2, b2, w3, b3 = init_params(kp, input_size, hidden_sizes)

    prepared = prepare_params(w1, b1, w2, b2, w3, b3)
    out = discriminator_forward(x, prepared)
    out = jax.block_until_ready(out)
    assert out.shape == (batch, 1)

    # Reference matching the kernel's cast points (layers 1-2: bf16 MXU
    # operands, f32 accumulate; layer 3 pure f32) -- tight tolerance.
    xb = x.astype(jnp.bfloat16)
    w1b, w2b = w1.astype(jnp.bfloat16), w2.astype(jnp.bfloat16)
    r1 = jnp.maximum(jnp.dot(xb, w1b, preferred_element_type=jnp.float32) + b1, 0.0)
    r2 = jnp.maximum(jnp.dot(r1.astype(jnp.bfloat16), w2b,
                             preferred_element_type=jnp.float32) + b2, 0.0)
    ref_bf16 = jax.nn.sigmoid(r2 @ w3 + b3)
    assert jnp.allclose(out, ref_bf16, atol=2e-3, rtol=2e-3)

    # Pure f32 reference (loose tolerance -- bf16 MXU operands in layers 1-2).
    f1 = jnp.maximum(x @ w1 + b1, 0.0)
    f2 = jnp.maximum(f1 @ w2 + b2, 0.0)
    ref_f32 = jax.nn.sigmoid(f2 @ w3 + b3)
    assert jnp.allclose(out, ref_f32, atol=3e-2, rtol=3e-2)

    print("KERNEL_OK")
</pallas_src>

<mosaic_0001>
module attributes {stable_mosaic.version = 11 : i64} {
  func.func @_disc_kernel(%arg0: i32, %arg1: memref<8x32xf32, #tpu.memory_space<vmem>>, %arg2: memref<32x128xbf16, #tpu.memory_space<vmem>>, %arg3: memref<1x128xf32, #tpu.memory_space<vmem>>, %arg4: memref<128x128xbf16, #tpu.memory_space<vmem>>, %arg5: memref<1x128xf32, #tpu.memory_space<vmem>>, %arg6: memref<1x128xf32, #tpu.memory_space<vmem>>, %arg7: memref<1xf32, #tpu.memory_space<smem>>, %arg8: memref<8x1xf32, #tpu.memory_space<vmem>>) attributes {dimension_semantics = [#tpu.dimension_semantics<parallel>], iteration_bounds = array<i64: 1>, scalar_prefetch = 0 : i64, scratch_operands = 0 : i64, tpu.core_type = #tpu.core_type<tc>, window_params = [{transform_indices = @transform_0, window_bounds = array<i64: 8, 32>}, {pipeline_mode = #tpu.pipeline_mode<synchronous>, transform_indices = @transform_1, window_bounds = array<i64: 32, 128>}, {pipeline_mode = #tpu.pipeline_mode<synchronous>, transform_indices = @transform_2, window_bounds = array<i64: 1, 128>}, {pipeline_mode = #tpu.pipeline_mode<synchronous>, transform_indices = @transform_3, window_bounds = array<i64: 128, 128>}, {pipeline_mode = #tpu.pipeline_mode<synchronous>, transform_indices = @transform_4, window_bounds = array<i64: 1, 128>}, {pipeline_mode = #tpu.pipeline_mode<synchronous>, transform_indices = @transform_5, window_bounds = array<i64: 1, 128>}, {transform_indices = @transform_6, window_bounds = array<i64: 1>}, {transform_indices = @transform_7, window_bounds = array<i64: 8, 1>}]} {
    %c0 = arith.constant 0 : index
    %c0_0 = arith.constant 0 : index
    %0 = vector.load %arg1[%c0, %c0_0] : memref<8x32xf32, #tpu.memory_space<vmem>>, vector<8x32xf32>
    %1 = arith.truncf %0 : vector<8x32xf32> to vector<8x32xbf16>
    %c0_1 = arith.constant 0 : index
    %c0_2 = arith.constant 0 : index
    %2 = vector.load %arg2[%c0_1, %c0_2] : memref<32x128xbf16, #tpu.memory_space<vmem>>, vector<32x128xbf16>
    %cst = arith.constant dense<0.000000e+00> : vector<8x128xf32>
    %3 = tpu.matmul %1, %2, %cst {dimension_numbers = #tpu.dot_dimension_numbers<[1], [0], [0], [1], [0, 0, 1, 1], [], []>} : vector<8x32xbf16>, vector<32x128xbf16>, vector<8x128xf32> -> vector<8x128xf32>
    %c0_3 = arith.constant 0 : index
    %c0_4 = arith.constant 0 : index
    %4 = vector.load %arg3[%c0_3, %c0_4] : memref<1x128xf32, #tpu.memory_space<vmem>>, vector<1x128xf32>
    %5 = vector.broadcast %4 : vector<1x128xf32> to vector<8x128xf32>
    %6 = arith.addf %3, %5 : vector<8x128xf32>
    %cst_5 = arith.constant 0.000000e+00 : f32
    %7 = vector.broadcast %cst_5 : f32 to vector<8x128xf32>
    %8 = arith.maximumf %6, %7 : vector<8x128xf32>
    %9 = arith.truncf %8 : vector<8x128xf32> to vector<8x128xbf16>
    %c0_6 = arith.constant 0 : index
    %c0_7 = arith.constant 0 : index
    %10 = vector.load %arg4[%c0_6, %c0_7] : memref<128x128xbf16, #tpu.memory_space<vmem>>, vector<128x128xbf16>
    %cst_8 = arith.constant dense<0.000000e+00> : vector<8x128xf32>
    %11 = tpu.matmul %9, %10, %cst_8 {dimension_numbers = #tpu.dot_dimension_numbers<[1], [0], [0], [1], [0, 0, 1, 1], [], []>} : vector<8x128xbf16>, vector<128x128xbf16>, vector<8x128xf32> -> vector<8x128xf32>
    %c0_9 = arith.constant 0 : index
    %c0_10 = arith.constant 0 : index
    %12 = vector.load %arg5[%c0_9, %c0_10] : memref<1x128xf32, #tpu.memory_space<vmem>>, vector<1x128xf32>
    %13 = vector.broadcast %12 : vector<1x128xf32> to vector<8x128xf32>
    %14 = arith.addf %11, %13 : vector<8x128xf32>
    %cst_11 = arith.constant 0.000000e+00 : f32
    %15 = vector.broadcast %cst_11 : f32 to vector<8x128xf32>
    %16 = arith.maximumf %14, %15 : vector<8x128xf32>
    %c0_12 = arith.constant 0 : index
    %c0_13 = arith.constant 0 : index
    %17 = vector.load %arg6[%c0_12, %c0_13] : memref<1x128xf32, #tpu.memory_space<vmem>>, vector<1x128xf32>
    %18 = vector.broadcast %17 : vector<1x128xf32> to vector<8x128xf32>
    %19 = arith.mulf %16, %18 : vector<8x128xf32>
    %cst_14 = arith.constant dense<0.000000e+00> : vector<8xf32>
    %20 = vector.multi_reduction <add>, %19, %cst_14 [1] : vector<8x128xf32> to vector<8xf32>
    %21 = vector.shape_cast %20 : vector<8xf32> to vector<8x1xf32>
    %c0_15 = arith.constant 0 : index
    %22 = memref.load %arg7[%c0_15] : memref<1xf32, #tpu.memory_space<smem>>
    %23 = vector.broadcast %22 : f32 to vector<8x1xf32>
    %24 = arith.addf %21, %23 : vector<8x1xf32>
    %25 = arith.negf %24 : vector<8x1xf32>
    %26 = math.exp %25 : vector<8x1xf32>
    %cst_16 = arith.constant 1.000000e+00 : f32
    %27 = vector.broadcast %cst_16 : f32 to vector<8x1xf32>
    %28 = arith.addf %27, %26 : vector<8x1xf32>
    %29 = arith.divf %27, %28 : vector<8x1xf32>
    %c0_17 = arith.constant 0 : index
    %c0_18 = arith.constant 0 : index
    %30 = vector.load %arg8[%c0_17, %c0_18] : memref<8x1xf32, #tpu.memory_space<vmem>>, vector<8x1xf32>
    tpu.vector_store %arg8[%c0_17, %c0_18], %29 {strides = array<i32>} : memref<8x1xf32, #tpu.memory_space<vmem>>, vector<8x1xf32>,
    return
  }
  func.func @transform_0(%arg0: i32) -> (i32, i32) {
    %c0_i32 = arith.constant 0 : i32
    %c0_i32_0 = arith.constant 0 : i32
    return %arg0, %c0_i32 : i32, i32
  }
  func.func @transform_1(%arg0: i32) -> (i32, i32) {
    %c0_i32 = arith.constant 0 : i32
    %c0_i32_0 = arith.constant 0 : i32
    %c0_i32_1 = arith.constant 0 : i32
    return %c0_i32, %c0_i32_0 : i32, i32
  }
  func.func @transform_2(%arg0: i32) -> (i32, i32) {
    %c0_i32 = arith.constant 0 : i32
    %c0_i32_0 = arith.constant 0 : i32
    %c0_i32_1 = arith.constant 0 : i32
    return %c0_i32, %c0_i32_0 : i32, i32
  }
  func.func @transform_3(%arg0: i32) -> (i32, i32) {
    %c0_i32 = arith.constant 0 : i32
    %c0_i32_0 = arith.constant 0 : i32
    %c0_i32_1 = arith.constant 0 : i32
    return %c0_i32, %c0_i32_0 : i32, i32
  }
  func.func @transform_4(%arg0: i32) -> (i32, i32) {
    %c0_i32 = arith.constant 0 : i32
    %c0_i32_0 = arith.constant 0 : i32
    %c0_i32_1 = arith.constant 0 : i32
    return %c0_i32, %c0_i32_0 : i32, i32
  }
  func.func @transform_5(%arg0: i32) -> (i32, i32) {
    %c0_i32 = arith.constant 0 : i32
    %c0_i32_0 = arith.constant 0 : i32
    %c0_i32_1 = arith.constant 0 : i32
    return %c0_i32, %c0_i32_0 : i32, i32
  }
  func.func @transform_6(%arg0: i32) -> i32 {
    %c0_i32 = arith.constant 0 : i32
    %c0_i32_0 = arith.constant 0 : i32
    return %c0_i32 : i32
  }
  func.func @transform_7(%arg0: i32) -> (i32, i32) {
    %c0_i32 = arith.constant 0 : i32
    %c0_i32_0 = arith.constant 0 : i32
    return %arg0, %c0_i32 : i32, i32
  }
}

</mosaic_0001>

<llo_original>
// kernel: tpu_custom_call.1
$region0: #{tpu_custom_call.1}
  #allocation0 [shape = 'u32[]', space=smem, size = 0x4, offset = 0x4, fixed_abs, tag = 'smem constant byte address 0x4 - core index']
  #allocation1 [shape = 'u32[144,128]{1,0:T(1,128)}', space=vmem, size = 0x12000, scoped, tag = 'internal scratch']
  #allocation2 [shape = 'f32[1]{0:T(128)S(6)}', space=smem, size = 0x200, scoped, tag = 'scoped memory for tpu_custom_call.1']
  %s0 = inlined_call_operand.hbm [shape: f32[8,32], index: 0, kind: input, shape index: {}]
  %s1 = inlined_call_operand.hbm [shape: bf16[32,128], index: 1, kind: input, shape index: {}]
  %s2 = inlined_call_operand.vmem [shape: f32[1,128], index: 2, kind: input, shape index: {}]
  %s3 = inlined_call_operand.hbm [shape: bf16[128,128], index: 3, kind: input, shape index: {}]
  %s4 = inlined_call_operand.vmem [shape: f32[1,128], index: 4, kind: input, shape index: {}]
  %s5 = inlined_call_operand.vmem [shape: f32[1,128], index: 5, kind: input, shape index: {}]
  %s6 = inlined_call_operand.<no memory space> [shape: f32[1], index: 6, kind: input, shape index: {}]
  %s7 = inlined_call_operand.vmem [shape: f32[8,1], index: 7, kind: output, shape index: {}]
  %s8 = sld [smem:[#allocation0]]
  $region50: #{tpu_custom_call.1} parent=0
    _
  %s10 = ssub.s32 1, %s8
  %s11 = scalar_select 0, %s10, %s8
  %12 = sst [smem:[#allocation2]] %s6
  $region1: #{tpu_custom_call.1} parent=0
    #allocation3 [shape = 'u8[4096]{0}', space=vmem, size = 0x1000, scoped, tag = 'input window, operand 0, single buffered']
    #allocation4 [shape = 's32[1]{0}', space=sflag, size = 0x4, scoped, tag = 'scoped memory for tpu_custom_call.1']
    #allocation5 [shape = 'u8[8192]{0}', space=vmem, size = 0x2000, scoped, tag = 'input window, operand 1, single buffered']
    #allocation6 [shape = 's32[1]{0}', space=sflag, size = 0x4, scoped, tag = 'scoped memory for tpu_custom_call.1']
    #allocation7 [shape = 'u8[32768]{0}', space=vmem, size = 0x8000, scoped, tag = 'input window, operand 3, single buffered']
    %13 = vsyncpa [#allocation4], 0
    %14 = vsyncpa [#allocation6], 0
    // Predicated region
    $region2: #{tpu_custom_call.1} parent=1 // pred_check
      _
    $region3: #{tpu_custom_call.1} parent=1 // pred_check_branch
      %16 = sbr.rel (0) target = $region5
    $region4: #{tpu_custom_call.1} parent=1 // pred_region
      %s18 = ssub.s32 128, 128
      %19 = vsyncadd [#allocation4], %s18
      %s21 = sshll.u32 [#allocation3], 4
      %s22 = int_to_ptr.vmem [resolvable:$true] %s21
      %24 = dma.hbm_to_vmem [thread:$0]  %s0, 128, %s22, [#allocation4]
    $region5: #{tpu_custom_call.1} parent=1 // pred_fallthru
      _
    // Predicated region
    $region6: #{tpu_custom_call.1} parent=1 // pred_check
      _
    $region7: #{tpu_custom_call.1} parent=1 // pred_check_branch
      %26 = sbr.rel (0) target = $region9
    $region8: #{tpu_custom_call.1} parent=1 // pred_region
      %s28 = ssub.s32 256, 256
      %29 = vsyncadd [#allocation6], %s28
      %s30 = sshll.u32 [#allocation5], 4
      %s31 = int_to_ptr.vmem [resolvable:$true] %s30
      %36 = dma.hbm_to_vmem [thread:$0]  %s1, 256, %s31, [#allocation6], 64, 64, 4
    $region9: #{tpu_custom_call.1} parent=1 // pred_fallthru
      _
    // Predicated region
    $region10: #{tpu_custom_call.1} parent=1 // pred_check
      _
    $region11: #{tpu_custom_call.1} parent=1 // pred_check_branch
      %38 = sbr.rel (0) target = $region13
    $region12: #{tpu_custom_call.1} parent=1 // pred_region
      _
    $region13: #{tpu_custom_call.1} parent=1 // pred_fallthru
      _
    // Predicated region
    $region14: #{tpu_custom_call.1} parent=1 // pred_check
      _
    $region15: #{tpu_custom_call.1} parent=1 // pred_check_branch
      %40 = sbr.rel (0) target = $region17
    $region16: #{tpu_custom_call.1} parent=1 // pred_region
      %s42 = ssub.s32 1024, 1024
      %43 = vsyncadd [#allocation6], %s42
      %s44 = sshll.u32 [#allocation7], 4
      %s45 = int_to_ptr.vmem [resolvable:$true] %s44
      %50 = dma.hbm_to_vmem [thread:$0]  %s3, 1024, %s45, [#allocation6], 64, 64, 4
    $region17: #{tpu_custom_call.1} parent=1 // pred_fallthru
      _
    // Predicated region
    $region18: #{tpu_custom_call.1} parent=1 // pred_check
      _
    $region19: #{tpu_custom_call.1} parent=1 // pred_check_branch
      %52 = sbr.rel (0) target = $region21
    $region20: #{tpu_custom_call.1} parent=1 // pred_region
      _
    $region21: #{tpu_custom_call.1} parent=1 // pred_fallthru
      _
    // Predicated region
    $region22: #{tpu_custom_call.1} parent=1 // pred_check
      _
    $region23: #{tpu_custom_call.1} parent=1 // pred_check_branch
      %54 = sbr.rel (0) target = $region25
    $region24: #{tpu_custom_call.1} parent=1 // pred_region
      _
    $region25: #{tpu_custom_call.1} parent=1 // pred_fallthru
      _
    // Predicated region
    $region26: #{tpu_custom_call.1} parent=1 // pred_check
      _
    $region27: #{tpu_custom_call.1} parent=1 // pred_check_branch
      %56 = sbr.rel (0) target = $region29
    $region28: #{tpu_custom_call.1} parent=1 // pred_region
      _
    $region29: #{tpu_custom_call.1} parent=1 // pred_fallthru
      _
    // Predicated region
    $region30: #{tpu_custom_call.1} parent=1 // pred_check
      _
    $region31: #{tpu_custom_call.1} parent=1 // pred_check_branch
      %58 = sbr.rel (0) target = $region33
    $region32: #{tpu_custom_call.1} parent=1 // pred_region
      %59 = dma.done [#allocation4], 128
    $region33: #{tpu_custom_call.1} parent=1 // pred_fallthru
      _
    // Predicated region
    $region34: #{tpu_custom_call.1} parent=1 // pred_check
      _
    $region35: #{tpu_custom_call.1} parent=1 // pred_check_branch
      %61 = sbr.rel (0) target = $region37
    $region36: #{tpu_custom_call.1} parent=1 // pred_region
      %62 = dma.done [#allocation6], 256
    $region37: #{tpu_custom_call.1} parent=1 // pred_fallthru
      _
    // Predicated region
    $region38: #{tpu_custom_call.1} parent=1 // pred_check
      _
    $region39: #{tpu_custom_call.1} parent=1 // pred_check_branch
      %64 = sbr.rel (0) target = $region41
    $region40: #{tpu_custom_call.1} parent=1 // pred_region
      %65 = dma.done [#allocation6], 1024
    $region41: #{tpu_custom_call.1} parent=1 // pred_fallthru
      _
    %v67 = vld [vmem:[#allocation3] sm:$0xff]
    %v68 = vpack.c.bf16 %v67, %v67
    %v69 = vld [vmem:[#allocation5] sm:$0xf]
    %v70 = vld [vmem:[#allocation5 + $0x4] sm:$0xf]
    %v71 = vld [vmem:[#allocation5 + $0x8] sm:$0xf]
    %v72 = vld [vmem:[#allocation5 + $0xc] sm:$0xf]
    %v73 = vld [vmem:[%s2] sm:$0x1]
    %v75 = vlaneseq
    %v76 = vshrl.u32 %v75, 7
    %v77 = vsub.s32 0, %v76
    %v78 = vrot.slane %v73, %v77
    %v84 = vunpack.c.l.b16 %v69
    %v85 = vunpack.c.l.b16 %v70
    %v86 = vunpack.c.l.b16 %v71
    %v87 = vunpack.c.l.b16 %v72
    %v88 = vpack.c.b16 %v85, %v84
    %v89 = vpack.c.b16 %v87, %v86
    %vm92 = vcmask 261120
    %v94 = vsel %vm92, %v68, 0
    %96 = vmatprep.subr.bf16.mxu0 0
    %97 = vmatpush1.bf16.msra.mxu0 %v88
    %98 = vmatprep.subr.bf16.mxu0 0
    %99 = vmatpush1.bf16.msra.mxu0 %v89
    %100 = vmatprep.subr.bf16.mxu0 0
    %101 = vmatpush1.bf16.msra.mxu0 0
    %102 = vmatprep.subr.bf16.mxu0 0
    %103 = vmatpush1.bf16.msra.mxu0 0
    %104 = vmatprep.subr.bf16.mxu0 0
    %105 = vmatpush1.bf16.msra.mxu0 0
    %106 = vmatprep.subr.bf16.mxu0 0
    %107 = vmatpush1.bf16.msra.mxu0 0
    %108 = vmatprep.subr.bf16.mxu0 0
    %109 = vmatpush1.bf16.msra.mxu0 0
    %110 = vmatprep.subr.bf16.mxu0 0
    %111 = vmatpush1.bf16.msra.mxu0 0
    %112 = vmatprep.subr.bf16.mxu0 0
    %113 = vmatpush1.bf16.msra.mxu0 0
    %114 = vmatprep.subr.bf16.mxu0 0
    %115 = vmatpush1.bf16.msra.mxu0 0
    %116 = vmatprep.subr.bf16.mxu0 0
    %117 = vmatpush1.bf16.msra.mxu0 0
    %118 = vmatprep.subr.bf16.mxu0 0
    %119 = vmatpush1.bf16.msra.mxu0 0
    %120 = vmatprep.subr.bf16.mxu0 0
    %121 = vmatpush1.bf16.msra.mxu0 0
    %122 = vmatprep.subr.bf16.mxu0 0
    %123 = vmatpush1.bf16.msra.mxu0 0
    %124 = vmatprep.subr.bf16.mxu0 0
    %125 = vmatpush1.bf16.msra.mxu0 0
    %126 = vmatprep.subr.bf16.mxu0 0
    %127 = vmatpush1.bf16.msra.mxu0 0
    %128 = vmatprep.mubr.bf16.mxu0 0
    %129 = vmatmul.mubr.bf16.gmra.mrb[0].mxu0 %v94
    %v130 = vpop.f32.mrb[0].mxu0
    %v131 = vadd.f32 %v78, %v130
    %v132 = vpop.f32.mrb[0].mxu0
    %v133 = vpop.f32.mrb[0].mxu0
    %v134 = vpop.f32.mrb[0].mxu0
    %135 = vdwg.mxu0
    %v136 = vmax.f32 %v131, 0.0
    %v137 = vpack.c.bf16 %v136, %v136
    %v138 = vld [vmem:[#allocation7] sm:$0xf]
    %v139 = vld [vmem:[#allocation7 + $0x4] sm:$0xf]
    %v140 = vld [vmem:[#allocation7 + $0x8] sm:$0xf]
    %v141 = vld [vmem:[#allocation7 + $0xc] sm:$0xf]
    %v142 = vld [vmem:[#allocation7 + $0x10] sm:$0xf]
    %v143 = vld [vmem:[#allocation7 + $0x14] sm:$0xf]
    %v144 = vld [vmem:[#allocation7 + $0x18] sm:$0xf]
    %v145 = vld [vmem:[#allocation7 + $0x1c] sm:$0xf]
    %v146 = vld [vmem:[#allocation7 + $0x20] sm:$0xf]
    %v147 = vld [vmem:[#allocation7 + $0x24] sm:$0xf]
    %v148 = vld [vmem:[#allocation7 + $0x28] sm:$0xf]
    %v149 = vld [vmem:[#allocation7 + $0x2c] sm:$0xf]
    %v150 = vld [vmem:[#allocation7 + $0x30] sm:$0xf]
    %v151 = vld [vmem:[#allocation7 + $0x34] sm:$0xf]
    %v152 = vld [vmem:[#allocation7 + $0x38] sm:$0xf]
    %v153 = vld [vmem:[#allocation7 + $0x3c] sm:$0xf]
    %v154 = vld [vmem:[%s4] sm:$0x1]
    %v156 = vlaneseq
    %v157 = vshrl.u32 %v156, 7
    %v158 = vsub.s32 0, %v157
    %v159 = vrot.slane %v154, %v158
    %v177 = vunpack.c.l.b16 %v138
    %v178 = vunpack.c.l.b16 %v139
    %v179 = vunpack.c.l.b16 %v140
    %v180 = vunpack.c.l.b16 %v141
    %v181 = vunpack.c.l.b16 %v142
    %v182 = vunpack.c.l.b16 %v143
    %v183 = vunpack.c.l.b16 %v144
    %v184 = vunpack.c.l.b16 %v145
    %v185 = vunpack.c.l.b16 %v146
    %v186 = vunpack.c.l.b16 %v147
    %v187 = vunpack.c.l.b16 %v148
    %v188 = vunpack.c.l.b16 %v149
    %v189 = vunpack.c.l.b16 %v150
    %v190 = vunpack.c.l.b16 %v151
    %v191 = vunpack.c.l.b16 %v152
    %v192 = vunpack.c.l.b16 %v153
    %v193 = vpack.c.b16 %v178, %v177
    %v194 = vpack.c.b16 %v180, %v179
    %v195 = vpack.c.b16 %v182, %v181
    %v196 = vpack.c.b16 %v184, %v183
    %v197 = vpack.c.b16 %v186, %v185
    %v198 = vpack.c.b16 %v188, %v187
    %v199 = vpack.c.b16 %v190, %v189
    %v200 = vpack.c.b16 %v192, %v191
    %209 = vmatprep.subr.bf16.mxu0 0
    %210 = vmatpush1.bf16.msra.mxu0 %v193
    %211 = vmatprep.subr.bf16.mxu0 0
    %212 = vmatpush1.bf16.msra.mxu0 %v194
    %213 = vmatprep.subr.bf16.mxu0 0
    %214 = vmatpush1.bf16.msra.mxu0 %v195
    %215 = vmatprep.subr.bf16.mxu0 0
    %216 = vmatpush1.bf16.msra.mxu0 %v196
    %217 = vmatprep.subr.bf16.mxu0 0
    %218 = vmatpush1.bf16.msra.mxu0 %v197
    %219 = vmatprep.subr.bf16.mxu0 0
    %220 = vmatpush1.bf16.msra.mxu0 %v198
    %221 = vmatprep.subr.bf16.mxu0 0
    %222 = vmatpush1.bf16.msra.mxu0 %v199
    %223 = vmatprep.subr.bf16.mxu0 0
    %224 = vmatpush1.bf16.msra.mxu0 %v200
    %225 = vmatprep.subr.bf16.mxu0 0
    %226 = vmatpush1.bf16.msra.mxu0 0
    %227 = vmatprep.subr.bf16.mxu0 0
    %228 = vmatpush1.bf16.msra.mxu0 0
    %229 = vmatprep.subr.bf16.mxu0 0
    %230 = vmatpush1.bf16.msra.mxu0 0
    %231 = vmatprep.subr.bf16.mxu0 0
    %232 = vmatpush1.bf16.msra.mxu0 0
    %233 = vmatprep.subr.bf16.mxu0 0
    %234 = vmatpush1.bf16.msra.mxu0 0
    %235 = vmatprep.subr.bf16.mxu0 0
    %236 = vmatpush1.bf16.msra.mxu0 0
    %237 = vmatprep.subr.bf16.mxu0 0
    %238 = vmatpush1.bf16.msra.mxu0 0
    %239 = vmatprep.subr.bf16.mxu0 0
    %240 = vmatpush1.bf16.msra.mxu0 0
    %241 = vmatprep.mubr.bf16.mxu0 0
    %242 = vmatmul.mubr.bf16.gmra.mrb[0].mxu0 %v137
    %v243 = vpop.f32.mrb[0].mxu0
    %v244 = vadd.f32 %v159, %v243
    %v245 = vpop.f32.mrb[0].mxu0
    %v246 = vpop.f32.mrb[0].mxu0
    %v247 = vpop.f32.mrb[0].mxu0
    %248 = vdwg.mxu0
    %v249 = vmax.f32 %v244, 0.0
    %v250 = vld [vmem:[%s5] sm:$0x1]
    %v252 = vlaneseq
    %v253 = vshrl.u32 %v252, 7
    %v254 = vsub.s32 0, %v253
    %v255 = vrot.slane %v250, %v254
    %v257 = vmul.f32 %v249, %v255
    %258 = vadd.xlane.f32.xlu0 %v257
    %v259 = vpop.xlane.xlu0 %258
    %s260 = sld [smem:[#allocation2]]
    %v261 = vstv %s260
    %v262 = vadd.f32 %v259, %v261
    %v263 = vxor.u32 %v262, 2147483648
    %v264 = vmul.f32 %v263, 1.442695
    %v265 = vpow.pop %v264
    %v266 = vadd.f32 %v265, 1.0
    %v267 = vrcp.pop %v266
    %v268 = vmul.f32 1.0, %v267
    %vm269 = vcmask 7168
    %270 = vst.msk [vmem:[%s7] sm:$0xff] %vm269, %v268
    // Predicated region
    $region42: #{tpu_custom_call.1} parent=1 // pred_check
      _
    $region43: #{tpu_custom_call.1} parent=1 // pred_check_branch
      %272 = sbr.rel (0) target = $region45
    $region44: #{tpu_custom_call.1} parent=1 // pred_region
      _
    $region45: #{tpu_custom_call.1} parent=1 // pred_fallthru
      _
    // Predicated region
    $region46: #{tpu_custom_call.1} parent=1 // pred_check
      _
    $region47: #{tpu_custom_call.1} parent=1 // pred_check_branch
      %274 = sbr.rel (0) target = $region49
    $region48: #{tpu_custom_call.1} parent=1 // pred_region
      _
    $region49: #{tpu_custom_call.1} parent=1 // pred_fallthru
      _
    %275 = vsyncpa [#allocation4], 1
    %276 = vsyncpa [#allocation6], 1

</llo_original>
